<compile_context>
chip_gen: v7x
topology: tpu7x:2x2x1
jax: 0.10.0
libtpu: 0.0.40
codegen_flags: <defaults>
</compile_context>

<pallas_src>
import jax
import jax.numpy as jnp
from jax.experimental import pallas as pl
from jax.experimental.pallas import tpu as pltpu

# ----------------------------------------------------------------------------
# Hyperparameters (undefined globals in the original PyTorch script; fixed here)
# ----------------------------------------------------------------------------
KERN1 = 2            # conv1 kernel_size == stride
KERN2 = 2            # conv2 kernel_size == stride
KERN3 = 2            # maxpool kernel_size == stride
NUM_CLASSES = 4
SEQ_LEN = 128        # input length L
BATCH = 2
C1, C2 = 10, 20      # conv channel counts from the module definition

T1 = SEQ_LEN // KERN1      # 64  after conv1
T2 = T1 // KERN3           # 32  after pool1
T3 = T2 // KERN2           # 16  after conv2
T4 = T3 // KERN3           # 8   after pool2
LANE1 = T4 * C1 * KERN2    # 160 lane width of conv1/pool1 tiles, order (m, c1, k2)
FC_DIM = C2 * T4           # 160 lane width of conv2/pool2 tiles, order (c2, m)
                           #      == PyTorch x.view(N, -1) flatten order

_VMEM = pl.BlockSpec(memory_space=pltpu.MemorySpace.VMEM)


# ----------------------------------------------------------------------------
# The single fused kernel
# ----------------------------------------------------------------------------
def _net_fused_kernel(xe_ref, xo_ref, w1e_ref, w1o_ref, b1_ref,
                      w2_ref, b2_ref, wfc_ref, bfc_ref, o_ref):
    # conv1 (kernel=stride=2, one input channel) on the VPU:
    #   rows = (p, q, n), lanes = (m, c1, k2)  -> every conv1 output exactly once.
    y1 = xe_ref[...] * w1e_ref[...] + xo_ref[...] * w1o_ref[...] + b1_ref[...]

    # pool1 + relu: the two pool positions (p) are the contiguous row halves.
    h = y1.shape[0] // 2
    h1 = jnp.maximum(jnp.maximum(y1[:h, :], y1[h:, :]), 0.0)        # (2N*2, 160)

    # conv2 with the flatten permutation folded into a block-diagonal weight:
    #   (q*N+n, m*20 + c1*2 + k2) @ (160, 160) -> (q*N+n, c2*T4 + m)   [MXU]
    y2 = jnp.dot(h1, w2_ref[...], preferred_element_type=jnp.float32) + b2_ref[...]

    # pool2 + relu: the two pool positions (q) are the contiguous row halves.
    h = y2.shape[0] // 2
    h2 = jnp.maximum(jnp.maximum(y2[:h, :], y2[h:, :]), 0.0)        # (N, 160)

    # fc + log_softmax (h2 lanes are already PyTorch flatten order).
    z = jnp.dot(h2, wfc_ref[...], preferred_element_type=jnp.float32) + bfc_ref[...]
    zmax = jnp.max(z, axis=1, keepdims=True)
    lse = jnp.log(jnp.sum(jnp.exp(z - zmax), axis=1, keepdims=True)) + zmax
    o_ref[...] = z - lse


def _fused_forward(xe, xo, kparams, batch):
    w1e, w1o, b1r, w2big, b2r, wfct, bfcr = kparams
    return pl.pallas_call(
        _net_fused_kernel,
        out_shape=jax.ShapeDtypeStruct((batch, NUM_CLASSES), jnp.float32),
        in_specs=[_VMEM] * 9,
        out_specs=_VMEM,
    )(xe, xo, w1e, w1o, b1r, w2big, b2r, wfct, bfcr)


# ----------------------------------------------------------------------------
# Parameters (deterministic init, PyTorch-shaped: Conv1d (O, I, K), Linear (O, I))
# ----------------------------------------------------------------------------
def init_params(key):
    ks = jax.random.split(key, 6)

    def u(k, shape, fan_in):
        bound = 1.0 / float(fan_in) ** 0.5
        return jax.random.uniform(k, shape, jnp.float32, -bound, bound)

    w1 = u(ks[0], (C1, 1, KERN1), 1 * KERN1)
    b1 = u(ks[1], (C1,), 1 * KERN1)
    w2 = u(ks[2], (C2, C1, KERN2), C1 * KERN2)
    b2 = u(ks[3], (C2,), C1 * KERN2)
    wfc = u(ks[4], (NUM_CLASSES, FC_DIM), FC_DIM)
    bfc = u(ks[5], (NUM_CLASSES,), FC_DIM)
    return w1, b1, w2, b2, wfc, bfc


def prepare_params(params):
    """One-time (outside the hot path) repack of PyTorch-shaped weights into the
    kernel's lane-dense layouts."""
    w1, b1, w2, b2, wfc, bfc = params

    # conv1 taps / bias broadcast along the (m, c1, k2) lane order.
    def _lane1(vec_c1):
        return jnp.broadcast_to(vec_c1[None, :, None],
                                (T4, C1, KERN2)).reshape(1, LANE1)

    w1e = _lane1(w1[:, 0, 0])
    w1o = _lane1(w1[:, 0, 1])
    b1r = _lane1(b1)

    # conv2 as a block-diagonal (160, 160) matrix:
    #   W2big[m'*C1*K2 + c1*K2 + k2, c2*T4 + m] = w2[c2, c1, k2] * (m' == m)
    w2k = jnp.transpose(w2, (1, 2, 0))                      # (C1, K2, C2)
    eye = jnp.eye(T4, dtype=w2.dtype)                       # (m', m)
    w2big = jnp.einsum('pm,ckd->pckdm', eye, w2k).reshape(LANE1, FC_DIM)
    b2r = jnp.broadcast_to(b2[:, None], (C2, T4)).reshape(1, FC_DIM)

    # FC: output lane order of conv2/pool2 already equals PyTorch flatten order,
    # so the folded weight is just Wfc.T (pre-transposed once).
    wfct = wfc.T                                            # (160, 4)
    bfcr = bfc.reshape(1, NUM_CLASSES)
    return w1e, w1o, b1r, w2big, b2r, wfct, bfcr


# ----------------------------------------------------------------------------
# Forward pass: tiny input repack (XLA) + ONE fused Pallas kernel
# ----------------------------------------------------------------------------
def _pack_input(x):
    # x: (N, 1, L); input index i = m*16 + q*8 + k2*4 + p*2 + k1
    n = x.shape[0]
    xr = x.reshape(n, T4, KERN3, KERN2, KERN3, KERN1)       # (n, m, q, k2, p, k1)
    xr = xr.transpose(4, 2, 0, 1, 3, 5)                     # (p, q, n, m, k2, k1)
    xe = xr[..., 0]                                         # (p, q, n, m, k2)
    xo = xr[..., 1]
    shape6 = (KERN3, KERN3, n, T4, C1, KERN2)
    xe = jnp.broadcast_to(xe[:, :, :, :, None, :], shape6).reshape(4 * n, LANE1)
    xo = jnp.broadcast_to(xo[:, :, :, :, None, :], shape6).reshape(4 * n, LANE1)
    return xe, xo


@jax.jit
def net_forward(x, kparams):
    xe, xo = _pack_input(x)
    return _fused_forward(xe, xo, kparams, x.shape[0])


# ----------------------------------------------------------------------------
# Pure-JAX reference (for validation only)
# ----------------------------------------------------------------------------
def reference_forward(x, params):
    w1, b1, w2, b2, wfc, bfc = params
    n = x.shape[0]
    hi = jax.lax.Precision.HIGHEST
    dn = ("NCH", "OIH", "NCH")
    y1 = jax.lax.conv_general_dilated(x, w1, (KERN1,), "VALID",
                                      dimension_numbers=dn, precision=hi)
    y1 = y1 + b1[None, :, None]
    p1 = jax.lax.reduce_window(y1, -jnp.inf, jax.lax.max,
                               (1, 1, KERN3), (1, 1, KERN3), "VALID")
    h1 = jnp.maximum(p1, 0.0)
    y2 = jax.lax.conv_general_dilated(h1, w2, (KERN2,), "VALID",
                                      dimension_numbers=dn, precision=hi)
    y2 = y2 + b2[None, :, None]
    p2 = jax.lax.reduce_window(y2, -jnp.inf, jax.lax.max,
                               (1, 1, KERN3), (1, 1, KERN3), "VALID")
    h2 = jnp.maximum(p2, 0.0)
    flat = h2.reshape(n, -1)
    z = jnp.dot(flat, wfc.T, precision=hi) + bfc
    return jax.nn.log_softmax(z, axis=1)


if __name__ == "__main__":
    key = jax.random.PRNGKey(0)
    kx, kp = jax.random.split(key)
    x = jax.random.normal(kx, (BATCH, 1, SEQ_LEN), jnp.float32)
    params = init_params(kp)
    kparams = prepare_params(params)     # one-time weight repack, not in hot path

    out = net_forward(x, kparams)
    out = jax.block_until_ready(out)

    assert out.shape == (BATCH, NUM_CLASSES), out.shape

    ref = jax.block_until_ready(reference_forward(x, params))
    assert jnp.allclose(out, ref, atol=2e-2, rtol=2e-2), (out, ref)
    # log_softmax rows must exponentiate to probabilities summing to 1
    assert jnp.allclose(jnp.sum(jnp.exp(out), axis=1), 1.0, atol=1e-4)

    print("KERNEL_OK")
</pallas_src>

<mosaic_0001>
module attributes {stable_mosaic.version = 11 : i64} {
  func.func @_net_fused_kernel(%arg0: memref<8x160xf32, #tpu.memory_space<vmem>>, %arg1: memref<8x160xf32, #tpu.memory_space<vmem>>, %arg2: memref<1x160xf32, #tpu.memory_space<vmem>>, %arg3: memref<1x160xf32, #tpu.memory_space<vmem>>, %arg4: memref<1x160xf32, #tpu.memory_space<vmem>>, %arg5: memref<160x160xf32, #tpu.memory_space<vmem>>, %arg6: memref<1x160xf32, #tpu.memory_space<vmem>>, %arg7: memref<160x4xf32, #tpu.memory_space<vmem>>, %arg8: memref<1x4xf32, #tpu.memory_space<vmem>>, %arg9: memref<2x4xf32, #tpu.memory_space<vmem>>) attributes {dimension_semantics = [], scalar_prefetch = 0 : i64, scratch_operands = 0 : i64, tpu.core_type = #tpu.core_type<tc>} {
    %c0 = arith.constant 0 : index
    %c0_0 = arith.constant 0 : index
    %0 = vector.load %arg0[%c0, %c0_0] : memref<8x160xf32, #tpu.memory_space<vmem>>, vector<8x160xf32>
    %c0_1 = arith.constant 0 : index
    %c0_2 = arith.constant 0 : index
    %1 = vector.load %arg2[%c0_1, %c0_2] : memref<1x160xf32, #tpu.memory_space<vmem>>, vector<1x160xf32>
    %2 = vector.broadcast %1 : vector<1x160xf32> to vector<8x160xf32>
    %3 = arith.mulf %0, %2 : vector<8x160xf32>
    %c0_3 = arith.constant 0 : index
    %c0_4 = arith.constant 0 : index
    %4 = vector.load %arg1[%c0_3, %c0_4] : memref<8x160xf32, #tpu.memory_space<vmem>>, vector<8x160xf32>
    %c0_5 = arith.constant 0 : index
    %c0_6 = arith.constant 0 : index
    %5 = vector.load %arg3[%c0_5, %c0_6] : memref<1x160xf32, #tpu.memory_space<vmem>>, vector<1x160xf32>
    %6 = vector.broadcast %5 : vector<1x160xf32> to vector<8x160xf32>
    %7 = arith.mulf %4, %6 : vector<8x160xf32>
    %8 = arith.addf %3, %7 : vector<8x160xf32>
    %c0_7 = arith.constant 0 : index
    %c0_8 = arith.constant 0 : index
    %9 = vector.load %arg4[%c0_7, %c0_8] : memref<1x160xf32, #tpu.memory_space<vmem>>, vector<1x160xf32>
    %10 = vector.broadcast %9 : vector<1x160xf32> to vector<8x160xf32>
    %11 = arith.addf %8, %10 : vector<8x160xf32>
    %12 = vector.extract_strided_slice %11 {offsets = [0, 0], sizes = [4, 160], strides = [1, 1]} : vector<8x160xf32> to vector<4x160xf32>
    %13 = vector.extract_strided_slice %11 {offsets = [4, 0], sizes = [4, 160], strides = [1, 1]} : vector<8x160xf32> to vector<4x160xf32>
    %14 = arith.maximumf %12, %13 : vector<4x160xf32>
    %cst = arith.constant 0.000000e+00 : f32
    %15 = vector.broadcast %cst : f32 to vector<4x160xf32>
    %16 = arith.maximumf %14, %15 : vector<4x160xf32>
    %c0_9 = arith.constant 0 : index
    %c0_10 = arith.constant 0 : index
    %17 = vector.load %arg5[%c0_9, %c0_10] : memref<160x160xf32, #tpu.memory_space<vmem>>, vector<160x160xf32>
    %cst_11 = arith.constant dense<0.000000e+00> : vector<4x160xf32>
    %18 = tpu.matmul %16, %17, %cst_11 {dimension_numbers = #tpu.dot_dimension_numbers<[1], [0], [0], [1], [0, 0, 1, 1], [], []>} : vector<4x160xf32>, vector<160x160xf32>, vector<4x160xf32> -> vector<4x160xf32>
    %c0_12 = arith.constant 0 : index
    %c0_13 = arith.constant 0 : index
    %19 = vector.load %arg6[%c0_12, %c0_13] : memref<1x160xf32, #tpu.memory_space<vmem>>, vector<1x160xf32>
    %20 = vector.broadcast %19 : vector<1x160xf32> to vector<4x160xf32>
    %21 = arith.addf %18, %20 : vector<4x160xf32>
    %22 = vector.extract_strided_slice %21 {offsets = [0, 0], sizes = [2, 160], strides = [1, 1]} : vector<4x160xf32> to vector<2x160xf32>
    %23 = vector.extract_strided_slice %21 {offsets = [2, 0], sizes = [2, 160], strides = [1, 1]} : vector<4x160xf32> to vector<2x160xf32>
    %24 = arith.maximumf %22, %23 : vector<2x160xf32>
    %cst_14 = arith.constant 0.000000e+00 : f32
    %25 = vector.broadcast %cst_14 : f32 to vector<2x160xf32>
    %26 = arith.maximumf %24, %25 : vector<2x160xf32>
    %c0_15 = arith.constant 0 : index
    %c0_16 = arith.constant 0 : index
    %27 = vector.load %arg7[%c0_15, %c0_16] : memref<160x4xf32, #tpu.memory_space<vmem>>, vector<160x4xf32>
    %cst_17 = arith.constant dense<0.000000e+00> : vector<2x4xf32>
    %28 = tpu.matmul %26, %27, %cst_17 {dimension_numbers = #tpu.dot_dimension_numbers<[1], [0], [0], [1], [0, 0, 1, 1], [], []>} : vector<2x160xf32>, vector<160x4xf32>, vector<2x4xf32> -> vector<2x4xf32>
    %c0_18 = arith.constant 0 : index
    %c0_19 = arith.constant 0 : index
    %29 = vector.load %arg8[%c0_18, %c0_19] : memref<1x4xf32, #tpu.memory_space<vmem>>, vector<1x4xf32>
    %30 = vector.broadcast %29 : vector<1x4xf32> to vector<2x4xf32>
    %31 = arith.addf %28, %30 : vector<2x4xf32>
    %cst_20 = arith.constant dense<0xFF800000> : vector<2xf32>
    %32 = vector.multi_reduction <maximumf>, %31, %cst_20 [1] : vector<2x4xf32> to vector<2xf32>
    %33 = vector.shape_cast %32 : vector<2xf32> to vector<2x1xf32>
    %34 = vector.broadcast %33 : vector<2x1xf32> to vector<2x4xf32>
    %35 = arith.subf %31, %34 : vector<2x4xf32>
    %36 = math.exp %35 : vector<2x4xf32>
    %cst_21 = arith.constant dense<0.000000e+00> : vector<2xf32>
    %37 = vector.multi_reduction <add>, %36, %cst_21 [1] : vector<2x4xf32> to vector<2xf32>
    %38 = vector.shape_cast %37 : vector<2xf32> to vector<2x1xf32>
    %39 = math.log %38 : vector<2x1xf32>
    %40 = arith.addf %39, %33 : vector<2x1xf32>
    %41 = vector.broadcast %40 : vector<2x1xf32> to vector<2x4xf32>
    %42 = arith.subf %31, %41 : vector<2x4xf32>
    %c0_22 = arith.constant 0 : index
    %c0_23 = arith.constant 0 : index
    %43 = vector.load %arg9[%c0_22, %c0_23] : memref<2x4xf32, #tpu.memory_space<vmem>>, vector<2x4xf32>
    tpu.vector_store %arg9[%c0_22, %c0_23], %42 {strides = array<i32>} : memref<2x4xf32, #tpu.memory_space<vmem>>, vector<2x4xf32>,
    return
  }
}

</mosaic_0001>

<llo_original>
// kernel: net_forward.1
$region0: #{net_forward.1}
  #allocation0 [shape = 'u32[]', space=smem, size = 0x4, offset = 0x4, fixed_abs, tag = 'smem constant byte address 0x4 - core index']
  #allocation1 [shape = 'u32[144,128]{1,0:T(1,128)}', space=vmem, size = 0x12000, scoped, tag = 'internal scratch']
  %s0 = inlined_call_operand.vmem [shape: f32[8,160], index: 0, kind: input, shape index: {}]
  %s1 = inlined_call_operand.vmem [shape: f32[8,160], index: 1, kind: input, shape index: {}]
  %s2 = inlined_call_operand.vmem [shape: f32[1,160], index: 2, kind: input, shape index: {}]
  %s3 = inlined_call_operand.vmem [shape: f32[1,160], index: 3, kind: input, shape index: {}]
  %s4 = inlined_call_operand.vmem [shape: f32[1,160], index: 4, kind: input, shape index: {}]
  %s5 = inlined_call_operand.vmem [shape: f32[160,160], index: 5, kind: input, shape index: {}]
  %s6 = inlined_call_operand.vmem [shape: f32[1,160], index: 6, kind: input, shape index: {}]
  %s7 = inlined_call_operand.vmem [shape: f32[160,4], index: 7, kind: input, shape index: {}]
  %s8 = inlined_call_operand.vmem [shape: f32[1,4], index: 8, kind: input, shape index: {}]
  %s9 = inlined_call_operand.hbm [shape: f32[2,4], index: 9, kind: output, shape index: {}]
  %s10 = sld [smem:[#allocation0]]
  $region46: #{net_forward.1} parent=0
    _
  %s12 = ssub.s32 1, %s10
  %s13 = scalar_select 0, %s12, %s10
  $region1: #{net_forward.1} parent=0
    #allocation2 [shape = 'u8[1024]{0}', space=vmem, size = 0x400, scoped, tag = 'output window, operand 0, single buffered']
    #allocation3 [shape = 's32[1]{0}', space=sflag, size = 0x4, scoped, tag = 'scoped memory for net_forward.1']
    %14 = vsyncpa [#allocation3], 0
    // Predicated region
    $region2: #{net_forward.1} parent=1 // pred_check
      _
    $region3: #{net_forward.1} parent=1 // pred_check_branch
      %16 = sbr.rel (0) target = $region5
    $region4: #{net_forward.1} parent=1 // pred_region
      _
    $region5: #{net_forward.1} parent=1 // pred_fallthru
      _
    // Predicated region
    $region6: #{net_forward.1} parent=1 // pred_check
      _
    $region7: #{net_forward.1} parent=1 // pred_check_branch
      %18 = sbr.rel (0) target = $region9
    $region8: #{net_forward.1} parent=1 // pred_region
      _
    $region9: #{net_forward.1} parent=1 // pred_fallthru
      _
    // Predicated region
    $region10: #{net_forward.1} parent=1 // pred_check
      _
    $region11: #{net_forward.1} parent=1 // pred_check_branch
      %20 = sbr.rel (0) target = $region13
    $region12: #{net_forward.1} parent=1 // pred_region
      _
    $region13: #{net_forward.1} parent=1 // pred_fallthru
      _
    // Predicated region
    $region14: #{net_forward.1} parent=1 // pred_check
      _
    $region15: #{net_forward.1} parent=1 // pred_check_branch
      %22 = sbr.rel (0) target = $region17
    $region16: #{net_forward.1} parent=1 // pred_region
      _
    $region17: #{net_forward.1} parent=1 // pred_fallthru
      _
    // Predicated region
    $region18: #{net_forward.1} parent=1 // pred_check
      _
    $region19: #{net_forward.1} parent=1 // pred_check_branch
      %24 = sbr.rel (0) target = $region21
    $region20: #{net_forward.1} parent=1 // pred_region
      _
    $region21: #{net_forward.1} parent=1 // pred_fallthru
      _
    // Predicated region
    $region22: #{net_forward.1} parent=1 // pred_check
      _
    $region23: #{net_forward.1} parent=1 // pred_check_branch
      %26 = sbr.rel (0) target = $region25
    $region24: #{net_forward.1} parent=1 // pred_region
      _
    $region25: #{net_forward.1} parent=1 // pred_fallthru
      _
    // Predicated region
    $region26: #{net_forward.1} parent=1 // pred_check
      _
    $region27: #{net_forward.1} parent=1 // pred_check_branch
      %28 = sbr.rel (0) target = $region29
    $region28: #{net_forward.1} parent=1 // pred_region
      _
    $region29: #{net_forward.1} parent=1 // pred_fallthru
      _
    // Predicated region
    $region30: #{net_forward.1} parent=1 // pred_check
      _
    $region31: #{net_forward.1} parent=1 // pred_check_branch
      %30 = sbr.rel (0) target = $region33
    $region32: #{net_forward.1} parent=1 // pred_region
      _
    $region33: #{net_forward.1} parent=1 // pred_fallthru
      _
    // Predicated region
    $region34: #{net_forward.1} parent=1 // pred_check
      _
    $region35: #{net_forward.1} parent=1 // pred_check_branch
      %32 = sbr.rel (0) target = $region37
    $region36: #{net_forward.1} parent=1 // pred_region
      _
    $region37: #{net_forward.1} parent=1 // pred_fallthru
      _
    %v33 = vld [vmem:[%s0] sm:$0xff]
    %v34 = vld [vmem:[%s0 + $0x8] sm:$0xff]
    %v35 = vld [vmem:[%s2] sm:$0x3]
    %v37 = vlaneseq
    %v38 = vshrl.u32 %v37, 7
    %v39 = vsub.s32 0, %v38
    %v40 = vrot.slane %v35, %v39
    %v41 = vlaneseq
    %v42 = vshrl.u32 %v41, 7
    %v43 = vsub.s32 1, %v42
    %v44 = vrot.slane %v35, %v43
    %v47 = vmul.f32 %v33, %v40
    %v48 = vmul.f32 %v34, %v44
    %v49 = vld [vmem:[%s1] sm:$0xff]
    %v50 = vld [vmem:[%s1 + $0x8] sm:$0xff]
    %v51 = vld [vmem:[%s3] sm:$0x3]
    %v53 = vlaneseq
    %v54 = vshrl.u32 %v53, 7
    %v55 = vsub.s32 0, %v54
    %v56 = vrot.slane %v51, %v55
    %v57 = vlaneseq
    %v58 = vshrl.u32 %v57, 7
    %v59 = vsub.s32 1, %v58
    %v60 = vrot.slane %v51, %v59
    %v63 = vmul.f32 %v49, %v56
    %v64 = vmul.f32 %v50, %v60
    %v65 = vadd.f32 %v47, %v63
    %v66 = vadd.f32 %v48, %v64
    %v67 = vld [vmem:[%s4] sm:$0x3]
    %v69 = vlaneseq
    %v70 = vshrl.u32 %v69, 7
    %v71 = vsub.s32 0, %v70
    %v72 = vrot.slane %v67, %v71
    %v73 = vlaneseq
    %v74 = vshrl.u32 %v73, 7
    %v75 = vsub.s32 1, %v74
    %v76 = vrot.slane %v67, %v75
    %v79 = vadd.f32 %v65, %v72
    %v80 = vadd.f32 %v66, %v76
    %v83 = vrot.slane %v79, 4
    %v84 = vrot.slane %v80, 4
    %v87 = vmax.f32 %v79, %v83
    %v88 = vmax.f32 %v80, %v84
    %v89 = vmax.f32 %v87, 0.0
    %v90 = vmax.f32 %v88, 0.0
    %v91 = vld [vmem:[%s5] sm:$0xff]
    %v92 = vld [vmem:[%s5 + $0x8] sm:$0xff]
    %v93 = vld [vmem:[%s5 + $0x10] sm:$0xff]
    %v94 = vld [vmem:[%s5 + $0x18] sm:$0xff]
    %v95 = vld [vmem:[%s5 + $0x20] sm:$0xff]
    %v96 = vld [vmem:[%s5 + $0x28] sm:$0xff]
    %v97 = vld [vmem:[%s5 + $0x30] sm:$0xff]
    %v98 = vld [vmem:[%s5 + $0x38] sm:$0xff]
    %v99 = vld [vmem:[%s5 + $0x40] sm:$0xff]
    %v100 = vld [vmem:[%s5 + $0x48] sm:$0xff]
    %v101 = vld [vmem:[%s5 + $0x50] sm:$0xff]
    %v102 = vld [vmem:[%s5 + $0x58] sm:$0xff]
    %v103 = vld [vmem:[%s5 + $0x60] sm:$0xff]
    %v104 = vld [vmem:[%s5 + $0x68] sm:$0xff]
    %v105 = vld [vmem:[%s5 + $0x70] sm:$0xff]
    %v106 = vld [vmem:[%s5 + $0x78] sm:$0xff]
    %v107 = vld [vmem:[%s5 + $0x80] sm:$0xff]
    %v108 = vld [vmem:[%s5 + $0x88] sm:$0xff]
    %v109 = vld [vmem:[%s5 + $0x90] sm:$0xff]
    %v110 = vld [vmem:[%s5 + $0x98] sm:$0xff]
    %v111 = vld [vmem:[%s5 + $0xa0] sm:$0xff]
    %v112 = vld [vmem:[%s5 + $0xa8] sm:$0xff]
    %v113 = vld [vmem:[%s5 + $0xb0] sm:$0xff]
    %v114 = vld [vmem:[%s5 + $0xb8] sm:$0xff]
    %v115 = vld [vmem:[%s5 + $0xc0] sm:$0xff]
    %v116 = vld [vmem:[%s5 + $0xc8] sm:$0xff]
    %v117 = vld [vmem:[%s5 + $0xd0] sm:$0xff]
    %v118 = vld [vmem:[%s5 + $0xd8] sm:$0xff]
    %v119 = vld [vmem:[%s5 + $0xe0] sm:$0xff]
    %v120 = vld [vmem:[%s5 + $0xe8] sm:$0xff]
    %v121 = vld [vmem:[%s5 + $0xf0] sm:$0xff]
    %v122 = vld [vmem:[%s5 + $0xf8] sm:$0xff]
    %v123 = vld [vmem:[%s5 + $0x100] sm:$0xff]
    %v124 = vld [vmem:[%s5 + $0x108] sm:$0xff]
    %v125 = vld [vmem:[%s5 + $0x110] sm:$0xff]
    %v126 = vld [vmem:[%s5 + $0x118] sm:$0xff]
    %v127 = vld [vmem:[%s5 + $0x120] sm:$0xff]
    %v128 = vld [vmem:[%s5 + $0x128] sm:$0xff]
    %v129 = vld [vmem:[%s5 + $0x130] sm:$0xff]
    %v130 = vld [vmem:[%s5 + $0x138] sm:$0xff]
    %v131 = vld [vmem:[%s6] sm:$0x3]
    %v133 = vlaneseq
    %v134 = vshrl.u32 %v133, 7
    %v135 = vsub.s32 0, %v134
    %v136 = vrot.slane %v131, %v135
    %v137 = vlaneseq
    %v138 = vshrl.u32 %v137, 7
    %v139 = vsub.s32 1, %v138
    %v140 = vrot.slane %v131, %v139
    %vm143 = vcmask 261120
    %v145 = vsel %vm143, %v90, 0
    %147 = vmatprep.subr.mxu0 %v92
    %148 = vmatpush1.msra.mxu0 %v91
    %149 = vmatprep.subr.mxu0 %v94
    %150 = vmatpush1.msra.mxu0 %v93
    %151 = vmatprep.subr.mxu0 %v96
    %152 = vmatpush1.msra.mxu0 %v95
    %153 = vmatprep.subr.mxu0 %v98
    %154 = vmatpush1.msra.mxu0 %v97
    %155 = vmatprep.subr.mxu0 %v100
    %156 = vmatpush1.msra.mxu0 %v99
    %157 = vmatprep.subr.mxu0 %v102
    %158 = vmatpush1.msra.mxu0 %v101
    %159 = vmatprep.subr.mxu0 %v104
    %160 = vmatpush1.msra.mxu0 %v103
    %161 = vmatprep.subr.mxu0 %v106
    %162 = vmatpush1.msra.mxu0 %v105
    %163 = vmatprep.subr.mxu0 %v108
    %164 = vmatpush1.msra.mxu0 %v107
    %165 = vmatprep.subr.mxu0 %v110
    %166 = vmatpush1.msra.mxu0 %v109
    %167 = vmatprep.subr.mxu0 %v112
    %168 = vmatpush1.msra.mxu0 %v111
    %169 = vmatprep.subr.mxu0 %v114
    %170 = vmatpush1.msra.mxu0 %v113
    %171 = vmatprep.subr.mxu0 %v116
    %172 = vmatpush1.msra.mxu0 %v115
    %173 = vmatprep.subr.mxu0 %v118
    %174 = vmatpush1.msra.mxu0 %v117
    %175 = vmatprep.subr.mxu0 %v120
    %176 = vmatpush1.msra.mxu0 %v119
    %177 = vmatprep.subr.mxu0 %v122
    %178 = vmatpush1.msra.mxu0 %v121
    %179 = vmatprep.subr.mxu0 %v124
    %180 = vmatpush1.msra.mxu0 %v123
    %181 = vmatprep.subr.mxu0 %v126
    %182 = vmatpush1.msra.mxu0 %v125
    %183 = vmatprep.subr.mxu0 %v128
    %184 = vmatpush1.msra.mxu0 %v127
    %185 = vmatprep.subr.mxu0 %v130
    %186 = vmatpush1.msra.mxu0 %v129
    %187 = vmatprep.subr.mxu0 0.0
    %188 = vmatpush1.msra.mxu0 0.0
    %189 = vmatprep.subr.mxu0 0.0
    %190 = vmatpush1.msra.mxu0 0.0
    %191 = vmatprep.subr.mxu0 0.0
    %192 = vmatpush1.msra.mxu0 0.0
    %193 = vmatprep.subr.mxu0 0.0
    %194 = vmatpush1.msra.mxu0 0.0
    %195 = vmatprep.subr.mxu0 0.0
    %196 = vmatpush1.msra.mxu0 0.0
    %197 = vmatprep.subr.mxu0 0.0
    %198 = vmatpush1.msra.mxu0 0.0
    %199 = vmatprep.subr.mxu0 0.0
    %200 = vmatpush1.msra.mxu0 0.0
    %201 = vmatprep.subr.mxu0 0.0
    %202 = vmatpush1.msra.mxu0 0.0
    %203 = vmatprep.subr.mxu0 0.0
    %204 = vmatpush1.msra.mxu0 0.0
    %205 = vmatprep.subr.mxu0 0.0
    %206 = vmatpush1.msra.mxu0 0.0
    %207 = vmatprep.subr.mxu0 0.0
    %208 = vmatpush1.msra.mxu0 0.0
    %209 = vmatprep.subr.mxu0 0.0
    %210 = vmatpush1.msra.mxu0 0.0
    %211 = vmatprep.mubr.f32.mxu0 %v145
    %212 = vmatmul.mubr.f32.gmra.mrb[0].mxu0 %v89
    %v213 = vpop.f32.mrb[0].mxu0
    %v214 = vadd.f32 %v136, %v213
    %v215 = vpop.f32.mrb[0].mxu0
    %v216 = vadd.f32 %v140, %v215
    %217 = vdwg.mxu0
    %v220 = vrot.slane %v214, 2
    %v221 = vrot.slane %v216, 2
    %v224 = vmax.f32 %v214, %v220
    %v225 = vmax.f32 %v216, %v221
    %v226 = vmax.f32 %v224, 0.0
    %v227 = vmax.f32 %v225, 0.0
    %v228 = vld [vmem:[%s7] sm:$0xff]
    %v229 = vld [vmem:[%s7 + $0x8] sm:$0xff]
    %v230 = vld [vmem:[%s7 + $0x10] sm:$0xff]
    %v231 = vld [vmem:[%s7 + $0x18] sm:$0xff]
    %v232 = vld [vmem:[%s7 + $0x20] sm:$0xff]
    %v233 = vld [vmem:[%s7 + $0x28] sm:$0xff]
    %v234 = vld [vmem:[%s7 + $0x30] sm:$0xff]
    %v235 = vld [vmem:[%s7 + $0x38] sm:$0xff]
    %v236 = vld [vmem:[%s7 + $0x40] sm:$0xff]
    %v237 = vld [vmem:[%s7 + $0x48] sm:$0xff]
    %v238 = vld [vmem:[%s7 + $0x50] sm:$0xff]
    %v239 = vld [vmem:[%s7 + $0x58] sm:$0xff]
    %v240 = vld [vmem:[%s7 + $0x60] sm:$0xff]
    %v241 = vld [vmem:[%s7 + $0x68] sm:$0xff]
    %v242 = vld [vmem:[%s7 + $0x70] sm:$0xff]
    %v243 = vld [vmem:[%s7 + $0x78] sm:$0xff]
    %v244 = vld [vmem:[%s7 + $0x80] sm:$0xff]
    %v245 = vld [vmem:[%s7 + $0x88] sm:$0xff]
    %v246 = vld [vmem:[%s7 + $0x90] sm:$0xff]
    %v247 = vld [vmem:[%s7 + $0x98] sm:$0xff]
    %v248 = vld [vmem:[%s8] sm:$0x1]
    %v250 = vlaneseq
    %v251 = vshrl.u32 %v250, 7
    %v252 = vsub.s32 0, %v251
    %v253 = vrot.slane %v248, %v252
    %v256 = vsel %vm143, %v227, 0
    %258 = vmatprep.subr.mxu0 0.0
    %259 = vmatpush1.msra.mxu0 %v228
    %260 = vmatprep.subr.mxu0 0.0
    %261 = vmatpush1.msra.mxu0 %v229
    %262 = vmatprep.subr.mxu0 0.0
    %263 = vmatpush1.msra.mxu0 %v230
    %264 = vmatprep.subr.mxu0 0.0
    %265 = vmatpush1.msra.mxu0 %v231
    %266 = vmatprep.subr.mxu0 0.0
    %267 = vmatpush1.msra.mxu0 %v232
    %268 = vmatprep.subr.mxu0 0.0
    %269 = vmatpush1.msra.mxu0 %v233
    %270 = vmatprep.subr.mxu0 0.0
    %271 = vmatpush1.msra.mxu0 %v234
    %272 = vmatprep.subr.mxu0 0.0
    %273 = vmatpush1.msra.mxu0 %v235
    %274 = vmatprep.subr.mxu0 0.0
    %275 = vmatpush1.msra.mxu0 %v236
    %276 = vmatprep.subr.mxu0 0.0
    %277 = vmatpush1.msra.mxu0 %v237
    %278 = vmatprep.subr.mxu0 0.0
    %279 = vmatpush1.msra.mxu0 %v238
    %280 = vmatprep.subr.mxu0 0.0
    %281 = vmatpush1.msra.mxu0 %v239
    %282 = vmatprep.subr.mxu0 0.0
    %283 = vmatpush1.msra.mxu0 %v240
    %284 = vmatprep.subr.mxu0 0.0
    %285 = vmatpush1.msra.mxu0 %v241
    %286 = vmatprep.subr.mxu0 0.0
    %287 = vmatpush1.msra.mxu0 %v242
    %288 = vmatprep.subr.mxu0 0.0
    %289 = vmatpush1.msra.mxu0 %v243
    %290 = vmatprep.subr.mxu0 0.0
    %291 = vmatpush1.msra.mxu0 %v244
    %292 = vmatprep.subr.mxu0 0.0
    %293 = vmatpush1.msra.mxu0 %v245
    %294 = vmatprep.subr.mxu0 0.0
    %295 = vmatpush1.msra.mxu0 %v246
    %296 = vmatprep.subr.mxu0 0.0
    %297 = vmatpush1.msra.mxu0 %v247
    %298 = vmatprep.subr.mxu0 0.0
    %299 = vmatpush1.msra.mxu0 0.0
    %300 = vmatprep.subr.mxu0 0.0
    %301 = vmatpush1.msra.mxu0 0.0
    %302 = vmatprep.subr.mxu0 0.0
    %303 = vmatpush1.msra.mxu0 0.0
    %304 = vmatprep.subr.mxu0 0.0
    %305 = vmatpush1.msra.mxu0 0.0
    %306 = vmatprep.subr.mxu0 0.0
    %307 = vmatpush1.msra.mxu0 0.0
    %308 = vmatprep.subr.mxu0 0.0
    %309 = vmatpush1.msra.mxu0 0.0
    %310 = vmatprep.subr.mxu0 0.0
    %311 = vmatpush1.msra.mxu0 0.0
    %312 = vmatprep.subr.mxu0 0.0
    %313 = vmatpush1.msra.mxu0 0.0
    %314 = vmatprep.subr.mxu0 0.0
    %315 = vmatpush1.msra.mxu0 0.0
    %316 = vmatprep.subr.mxu0 0.0
    %317 = vmatpush1.msra.mxu0 0.0
    %318 = vmatprep.subr.mxu0 0.0
    %319 = vmatpush1.msra.mxu0 0.0
    %320 = vmatprep.subr.mxu0 0.0
    %321 = vmatpush1.msra.mxu0 0.0
    %322 = vmatprep.mubr.f32.mxu0 %v256
    %323 = vmatmul.mubr.f32.gmra.mrb[0].mxu0 %v226
    %v324 = vpop.f32.mrb[0].mxu0
    %v325 = vadd.f32 %v253, %v324
    %v326 = vpop.f32.mrb[0].mxu0
    %327 = vdwg.mxu0
    %vm328 = vcmask 25600
    %v329 = vsel %vm328, %v325, -inf
    %330 = vmax.xlane.f32.xlu0 %v329
    %v331 = vpop.xlane.xlu0 %330
    %v332 = vsub.f32 %v325, %v331
    %v333 = vmul.f32 %v332, 1.442695
    %v334 = vpow.pop %v333
    %v335 = vsel %vm328, %v334, 0.0
    %336 = vadd.xlane.f32.xlu0 %v335
    %v337 = vpop.xlane.xlu0 %336
    %v338 = vlog2.pop %v337
    %v339 = vmul.f32 %v338, 0.6931472
    %v340 = vadd.f32 %v339, %v331
    %v341 = vsub.f32 %v325, %v340
    %342 = vst.msk [vmem:[#allocation2] sm:$0x3] %vm328, %v341
    // Predicated region
    $region38: #{net_forward.1} parent=1 // pred_check
      _
    $region39: #{net_forward.1} parent=1 // pred_check_branch
      %344 = sbr.rel (0) target = $region41
    $region40: #{net_forward.1} parent=1 // pred_region
      %s346 = ssub.s32 32, 32
      %347 = vsyncadd [#allocation3], %s346
      %s349 = sshll.u32 [#allocation2], 4
      %s350 = int_to_ptr.vmem [resolvable:$true] %s349
      %352 = dma.vmem_to_hbm [thread:$0]  %s350, 32, %s9, [#allocation3]
    $region41: #{net_forward.1} parent=1 // pred_fallthru
      _
    // Predicated region
    $region42: #{net_forward.1} parent=1 // pred_check
      _
    $region43: #{net_forward.1} parent=1 // pred_check_branch
      %354 = sbr.rel (0) target = $region45
    $region44: #{net_forward.1} parent=1 // pred_region
      %355 = dma.done [#allocation3], 32
    $region45: #{net_forward.1} parent=1 // pred_fallthru
      _
    %356 = vsyncpa [#allocation3], 1

</llo_original>
